<compile_context>
chip_gen: v6e
topology: v6e:2x2x1
jax: 0.10.0
libtpu: 0.0.40
codegen_flags: <defaults>
</compile_context>

<pallas_src>
import jax
import jax.numpy as jnp
from jax.experimental import pallas as pl
from jax.experimental.pallas import tpu as pltpu

_LANE = 128
_MAX_LANES = 512 * _LANE          # cap lane width of the flattened slab
_TARGET_BLOCK_BYTES = 4 * 1024 * 1024   # ~4 MiB per block (2x in + 2x out
                                        # double-buffers ≈ 16 MiB << 32 MiB
                                        # scoped VMEM, safe even on v7x)


def _copy_kernel(x_ref, o_ref):
    # Elementwise pass-through of the current lane-dense tile.
    o_ref[...] = x_ref[...]


@jax.jit
def network2_forward(x: jax.Array) -> jax.Array:
    """Pallas implementation of Network2.forward (identity pass-through).

    x: (N, C, H, W) array (any float dtype).
    returns: array identical to x (same shape/dtype).
    """
    orig_shape = x.shape
    total = 1
    for d in orig_shape:
        total *= int(d)

    # ---- choose a lane-dense flat 2-D layout -------------------------------
    if total % _LANE == 0:
        lanes = _LANE
        cap = min(total, _MAX_LANES)
        while lanes * 2 <= cap and total % (lanes * 2) == 0:
            lanes *= 2
        rows = total // lanes
    else:
        # Fallback: whole array as a single (1, total) block (block == full
        # array dims, so the (8, 128) constraint is satisfied trivially).
        rows, lanes = 1, total
    x2 = x.reshape(rows, lanes)

    # ---- choose the row tile (single block for small inputs) ---------------
    itemsize = jnp.dtype(x.dtype).itemsize
    target_rows = max(1, _TARGET_BLOCK_BYTES // (lanes * itemsize))
    if target_rows >= rows:
        tile_rows = rows                      # one block covers everything
    else:
        tile_rows = max(8, (target_rows // 8) * 8)   # keep sublane-aligned
    grid = (pl.cdiv(rows, tile_rows),)

    out = pl.pallas_call(
        _copy_kernel,
        out_shape=jax.ShapeDtypeStruct((rows, lanes), x.dtype),
        grid=grid,
        in_specs=[pl.BlockSpec((tile_rows, lanes), lambda i: (i, 0))],
        out_specs=pl.BlockSpec((tile_rows, lanes), lambda i: (i, 0)),
        # Identity semantics: let the output alias the input buffer so no
        # extra HBM allocation / round-trip is materialized.
        input_output_aliases={0: 0},
        compiler_params=pltpu.CompilerParams(
            dimension_semantics=("parallel",),
        ),
    )(x2)

    return out.reshape(orig_shape)


if __name__ == "__main__":
    key = jax.random.PRNGKey(0)
    # Small NCHW input consistent with a conv-style module: batch=2,
    # channels=4, spatial=16x16.
    x = jax.random.normal(key, (2, 4, 16, 16), dtype=jnp.float32)

    y = network2_forward(x)
    y = jax.block_until_ready(y)

    # Sanity check: identity semantics.
    assert y.shape == x.shape and y.dtype == x.dtype
    assert bool(jnp.all(y == x))

    print("KERNEL_OK")
</pallas_src>

<mosaic_0001>
module attributes {stable_mosaic.version = 11 : i64} {
  func.func @_copy_kernel(%arg0: i32, %arg1: memref<1x2048xf32, #tpu.memory_space<vmem>>, %arg2: memref<1x2048xf32, #tpu.memory_space<vmem>>) attributes {dimension_semantics = [#tpu.dimension_semantics<parallel>], iteration_bounds = array<i64: 1>, scalar_prefetch = 0 : i64, scratch_operands = 0 : i64, tpu.core_type = #tpu.core_type<tc>, window_params = [{transform_indices = @transform_0, window_bounds = array<i64: 1, 2048>}, {transform_indices = @transform_1, window_bounds = array<i64: 1, 2048>}]} {
    %c0 = arith.constant 0 : index
    %c0_0 = arith.constant 0 : index
    %0 = vector.load %arg1[%c0, %c0_0] : memref<1x2048xf32, #tpu.memory_space<vmem>>, vector<1x2048xf32>
    %c0_1 = arith.constant 0 : index
    %c0_2 = arith.constant 0 : index
    %1 = vector.load %arg2[%c0_1, %c0_2] : memref<1x2048xf32, #tpu.memory_space<vmem>>, vector<1x2048xf32>
    tpu.vector_store %arg2[%c0_1, %c0_2], %0 {strides = array<i32>} : memref<1x2048xf32, #tpu.memory_space<vmem>>, vector<1x2048xf32>,
    return
  }
  func.func @transform_0(%arg0: i32) -> (i32, i32) {
    %c0_i32 = arith.constant 0 : i32
    %c0_i32_0 = arith.constant 0 : i32
    return %arg0, %c0_i32 : i32, i32
  }
  func.func @transform_1(%arg0: i32) -> (i32, i32) {
    %c0_i32 = arith.constant 0 : i32
    %c0_i32_0 = arith.constant 0 : i32
    return %arg0, %c0_i32 : i32, i32
  }
}

</mosaic_0001>

<llo_original>
// kernel: network2_forward.1
$region0: #{network2_forward.1}
  #allocation0 [shape = 'u32[]', space=smem, size = 0x4, offset = 0x4, fixed_abs, tag = 'smem constant byte address 0x4 - core index']
  #allocation1 [shape = 'u32[144,128]{1,0:T(1,128)}', space=vmem, size = 0x12000, scoped, tag = 'internal scratch']
  %s0 = inlined_call_operand.vmem [shape: f32[1,2048], index: 0, kind: input, shape index: {}, may-alias: {0,1}]
  %s1 = inlined_call_operand.vmem [shape: f32[1,2048], index: 1, kind: output, shape index: {}, may-alias: {0,1}]
  %s2 = sld [smem:[#allocation0]]
  $region14: #{network2_forward.1} parent=0
    _
  %s4 = ssub.s32 1, %s2
  %s5 = scalar_select 0, %s4, %s2
  // Predicated region
  $region2: #{network2_forward.1} parent=0 // pred_check
    _
  $region3: #{network2_forward.1} parent=0 // pred_check_branch
    %7 = sbr.rel (0) target = $region5
  $region4: #{network2_forward.1} parent=0 // pred_region
    _
  $region5: #{network2_forward.1} parent=0 // pred_fallthru
    _
  %v8 = vld [vmem:[%s0] sm:$0xff]
  %v9 = vld [vmem:[%s0 + $0x8] sm:$0xff]
  %10 = vst [vmem:[%s1] sm:$0xff] %v8
  %11 = vst [vmem:[%s1 + $0x8] sm:$0xff] %v9
  // Predicated region
  $region6: #{network2_forward.1} parent=0 // pred_check
    _
  $region7: #{network2_forward.1} parent=0 // pred_check_branch
    %13 = sbr.rel (0) target = $region9
  $region8: #{network2_forward.1} parent=0 // pred_region
    _
  $region9: #{network2_forward.1} parent=0 // pred_fallthru
    _
  // Predicated region
  $region10: #{network2_forward.1} parent=0 // pred_check
    _
  $region11: #{network2_forward.1} parent=0 // pred_check_branch
    %15 = sbr.rel (0) target = $region13
  $region12: #{network2_forward.1} parent=0 // pred_region
    _
  $region13: #{network2_forward.1} parent=0 // pred_fallthru
    _

</llo_original>
